<compile_context>
chip_gen: v6e
topology: v6e:2x2x1
jax: 0.10.0
libtpu: 0.0.40
codegen_flags: <defaults>
</compile_context>

<pallas_src>
import functools

import jax
import jax.numpy as jnp
from jax.experimental import pallas as pl
from jax.experimental.pallas import tpu as pltpu

BN_EPS = 1e-5


def fcblock_kernel(x_ref, w_ref, gb_ref, o_ref, acc_ref=None, *, matmul_dtype, num_k):
    j = pl.program_id(0)

    # Partial product for this (j, k) tile.  Weights stay in PyTorch (out, in) layout;
    # trans-B is handled by dot_general dimension numbers so the MXU consumes it natively.
    # The .astype calls are no-ops: the wrapper already pre-cast both operands.
    partial_y = jax.lax.dot_general(
        x_ref[...].astype(matmul_dtype),
        w_ref[...].astype(matmul_dtype),
        dimension_numbers=(((1,), (1,)), ((), ())),
        preferred_element_type=jnp.float32,
    )

    def bn_relu_store(y):
        # BatchNorm1d training mode: exact full-batch statistics (batch axis never tiled),
        # biased variance, folded into a single per-feature scale/shift FMA + ReLU.
        mean = jnp.mean(y, axis=0, keepdims=True)
        centered = y - mean
        var = jnp.mean(centered * centered, axis=0, keepdims=True)
        gb = gb_ref[j]                              # (2, TN) tile of resident BN params
        scale = gb[0:1, :] * jax.lax.rsqrt(var + BN_EPS)   # EUP rsqrt, free slot
        shift = gb[1:2, :] - mean * scale
        o_ref[...] = jnp.maximum(y * scale + shift, 0.0).astype(o_ref.dtype)

    if num_k == 1:
        # Single K step: epilogue straight from the MXU result, no accumulator traffic.
        bn_relu_store(partial_y)
    else:
        k = pl.program_id(1)

        @pl.when(k == 0)
        def _init():
            acc_ref[...] = jnp.zeros_like(acc_ref)

        acc_ref[...] += partial_y

        @pl.when(k == num_k - 1)
        def _finalize():
            bn_relu_store(acc_ref[...])


def fc_block(x, w, gamma, beta, *, matmul_dtype=jnp.bfloat16, out_dtype=None,
             tn=None, tk=None):
    """FCBlock forward (training-mode BatchNorm).

    x:     (B, H_in)   activations
    w:     (H_out, H_in) nn.Linear weight in PyTorch (out_features, in_features) layout
    gamma: (H_out,)    BatchNorm1d weight
    beta:  (H_out,)    BatchNorm1d bias

    The Linear bias is intentionally not an input: with training-mode BatchNorm it is
    cancelled exactly by the mean subtraction, so the output is unchanged without it.
    """
    B, H_in = x.shape
    H_out, H_in_w = w.shape
    assert H_in_w == H_in, "weight must be (out_features, in_features)"
    out_dtype = x.dtype if out_dtype is None else out_dtype
    mm_bytes = jnp.dtype(matmul_dtype).itemsize
    out_bytes = jnp.dtype(out_dtype).itemsize

    # ---- output-feature (lane) tile: MXU-width sized, grid stays lane-dense ----
    if tn is None:
        if H_out % 256 == 0 and H_out // 256 >= 2:
            tn = 256          # v6e/v7x native MXU width; grid length >= 2 keeps both TCs busy
        elif H_out % 128 == 0:
            tn = 128          # v5e native width / small grids
        else:
            tn = H_out        # tiny-H fallback: single full-array block
    assert H_out % tn == 0, "tn must divide out_features"
    n_tiles_n = H_out // tn

    # ---- contracting (K) tile: only split when full-row weight tiles would blow VMEM ----
    if tk is None:
        full_row_tile = 2 * tn * H_in * mm_bytes          # double-buffered full-row weight tile
        if full_row_tile > 16 * 1024 * 1024 and H_in % 2048 == 0:
            tk = 2048
        else:
            tk = H_in
    assert H_in % tk == 0, "tk must divide in_features"
    assert tk == H_in or tk % 128 == 0, "K tiles must be lane-aligned (multiple of 128)"
    num_k = H_in // tk

    # ---- one-time wrapper casts: feed the MXU (and HBM) the narrow dtype directly ----
    x_mm = x if x.dtype == matmul_dtype else x.astype(matmul_dtype)
    w_mm = w if w.dtype == matmul_dtype else w.astype(matmul_dtype)

    # Packed BN params, tiled along a leading (non-lane) axis so the kernel can pick its
    # (2, tn) slice with a leading-dim dynamic index while the whole array stays resident.
    gb = jnp.stack(
        [gamma.astype(jnp.float32).reshape(n_tiles_n, tn),
         beta.astype(jnp.float32).reshape(n_tiles_n, tn)],
        axis=1,
    )  # (n_tiles_n, 2, tn)

    # ---- block specs ----
    if num_k == 1:
        # Constant index_map -> never re-fetched; single buffer halves resident-x VMEM.
        x_spec = pl.BlockSpec((B, tk), lambda j, k: (0, k), pipeline_mode=pl.Buffered(1))
    else:
        x_spec = pl.BlockSpec((B, tk), lambda j, k: (0, k))
    w_spec = pl.BlockSpec((tn, tk), lambda j, k: (j, k))
    gb_spec = pl.BlockSpec((n_tiles_n, 2, tn), lambda j, k: (0, 0, 0),
                           pipeline_mode=pl.Buffered(1))
    out_spec = pl.BlockSpec((B, tn), lambda j, k: (0, j))

    scratch = [] if num_k == 1 else [pltpu.VMEM((B, tn), jnp.float32)]

    # ---- explicit VMEM budget (default scoped limit is hit long before physical VMEM;
    #      cap at 56 MiB so a v6e-sized budget is never carried onto v7x's 64 MiB) ----
    x_buf = (1 if num_k == 1 else 2) * B * tk * mm_bytes
    w_buf = 2 * tn * tk * mm_bytes
    gb_buf = n_tiles_n * 8 * tn * 4                  # sublane dim 2 pads to 8
    o_buf = 2 * B * tn * out_bytes
    acc_buf = (B * tn * 4) if num_k > 1 else 0
    tmp_buf = 4 * B * tn * 4                         # f32 epilogue temporaries headroom
    vmem_limit = min(56 * 1024 * 1024,
                     max(32 * 1024 * 1024,
                         int(1.5 * (x_buf + w_buf + gb_buf + o_buf + acc_buf + tmp_buf))))

    cost = pl.CostEstimate(
        flops=2 * B * H_in * H_out,
        transcendentals=0,
        bytes_accessed=(B * H_in * mm_bytes + H_out * H_in * mm_bytes
                        + 2 * H_out * 4 + B * H_out * out_bytes),
    )

    kernel = functools.partial(fcblock_kernel, matmul_dtype=matmul_dtype, num_k=num_k)

    return pl.pallas_call(
        kernel,
        out_shape=jax.ShapeDtypeStruct((B, H_out), out_dtype),
        grid_spec=pltpu.PrefetchScalarGridSpec(
            num_scalar_prefetch=0,
            grid=(n_tiles_n, num_k),
            in_specs=[x_spec, w_spec, gb_spec],
            out_specs=out_spec,
            scratch_shapes=scratch,
        ),
        compiler_params=pltpu.CompilerParams(
            # Independent output-feature tiles shard across v7x's 2 TensorCores;
            # the contracting axis is a reduction -> arbitrary.
            dimension_semantics=("parallel", "arbitrary"),
            vmem_limit_bytes=vmem_limit,
        ),
        cost_estimate=cost,
    )(x_mm, w_mm, gb)


def fc_block_ref(x, w, b, gamma, beta):
    """Pure-JAX reference matching PyTorch FCBlock.forward in training mode (bias included)."""
    y = jnp.dot(x, w.T, precision=jax.lax.Precision.HIGHEST) + b
    mean = jnp.mean(y, axis=0, keepdims=True)
    var = jnp.mean((y - mean) ** 2, axis=0, keepdims=True)
    y_bn = (y - mean) / jnp.sqrt(var + BN_EPS) * gamma + beta
    return jnp.maximum(y_bn, 0.0)


if __name__ == "__main__":
    key = jax.random.PRNGKey(0)

    def make_inputs(B, H):
        kx, kw, kb, kg, kbe = jax.random.split(jax.random.fold_in(key, H), 5)
        x = jax.random.normal(kx, (B, H), dtype=jnp.float32)
        bound = 1.0 / jnp.sqrt(jnp.float32(H))
        w = jax.random.uniform(kw, (H, H), minval=-bound, maxval=bound, dtype=jnp.float32)
        b = jax.random.uniform(kb, (H,), minval=-bound, maxval=bound, dtype=jnp.float32)
        gamma = 1.0 + 0.1 * jax.random.normal(kg, (H,), dtype=jnp.float32)
        beta = 0.1 * jax.random.normal(kbe, (H,), dtype=jnp.float32)
        return x, w, b, gamma, beta

    # (8, 256): lane-dense shape -> tiled "parallel" feature axis (TN=128, 2 tiles).
    # (8, 32):  tiny shape -> single full-array block fallback.
    for B, H in [(8, 256), (8, 32)]:
        x, w, b, gamma, beta = make_inputs(B, H)
        # Reference keeps the Linear bias -> also verifies BN cancels it exactly.
        ref = fc_block_ref(x, w, b, gamma, beta)

        for matmul_dtype, tol in [(jnp.bfloat16, 5e-2), (jnp.float32, 2e-3)]:
            out = jax.block_until_ready(
                fc_block(x, w, gamma, beta, matmul_dtype=matmul_dtype))
            assert out.shape == (B, H) and out.dtype == x.dtype
            assert jnp.allclose(out, ref, atol=tol, rtol=tol), (
                f"mismatch vs reference: H={H}, matmul_dtype={matmul_dtype}")

    # Exercise the K-tiled accumulator path (forced small TK -> grid (2, 2) + VMEM scratch).
    B, H = 8, 256
    x, w, b, gamma, beta = make_inputs(B, H)
    ref = fc_block_ref(x, w, b, gamma, beta)
    out = jax.block_until_ready(fc_block(x, w, gamma, beta, tk=128))
    assert out.shape == (B, H)
    assert jnp.allclose(out, ref, atol=5e-2, rtol=5e-2), "mismatch in K-tiled path"

    print("KERNEL_OK")
</pallas_src>

<mosaic_0001>
module attributes {stable_mosaic.version = 11 : i64} {
  func.func @fcblock_kernel(%arg0: i32, %arg1: i32, %arg2: memref<8x256xbf16, #tpu.memory_space<vmem>>, %arg3: memref<128x256xbf16, #tpu.memory_space<vmem>>, %arg4: memref<2x2x128xf32, #tpu.memory_space<vmem>>, %arg5: memref<8x128xf32, #tpu.memory_space<vmem>>) attributes {dimension_semantics = [#tpu.dimension_semantics<parallel>, #tpu.dimension_semantics<arbitrary>], iteration_bounds = array<i64: 2, 1>, scalar_prefetch = 0 : i64, scratch_operands = 0 : i64, tpu.core_type = #tpu.core_type<tc>, window_params = [{pipeline_mode = #tpu.pipeline_mode<synchronous>, transform_indices = @transform_0, window_bounds = array<i64: 8, 256>}, {transform_indices = @transform_1, window_bounds = array<i64: 128, 256>}, {pipeline_mode = #tpu.pipeline_mode<synchronous>, transform_indices = @transform_2, window_bounds = array<i64: 2, 2, 128>}, {transform_indices = @transform_3, window_bounds = array<i64: 8, 128>}]} {
    %c0 = arith.constant 0 : index
    %c0_0 = arith.constant 0 : index
    %0 = vector.load %arg2[%c0, %c0_0] : memref<8x256xbf16, #tpu.memory_space<vmem>>, vector<8x256xbf16>
    %c0_1 = arith.constant 0 : index
    %c0_2 = arith.constant 0 : index
    %1 = vector.load %arg3[%c0_1, %c0_2] : memref<128x256xbf16, #tpu.memory_space<vmem>>, vector<128x256xbf16>
    %cst = arith.constant dense<0.000000e+00> : vector<8x128xf32>
    %2 = tpu.matmul %0, %1, %cst {dimension_numbers = #tpu.dot_dimension_numbers<[1], [1], [0], [0], [0, 0, 1, 0], [], []>} : vector<8x256xbf16>, vector<128x256xbf16>, vector<8x128xf32> -> vector<8x128xf32>
    %cst_3 = arith.constant dense<0.000000e+00> : vector<128xf32>
    %3 = vector.multi_reduction <add>, %2, %cst_3 [0] : vector<8x128xf32> to vector<128xf32>
    %4 = vector.shape_cast %3 : vector<128xf32> to vector<1x128xf32>
    %cst_4 = arith.constant 8.000000e+00 : f32
    %5 = vector.broadcast %cst_4 : f32 to vector<1x128xf32>
    %6 = arith.divf %4, %5 : vector<1x128xf32>
    %7 = vector.broadcast %6 : vector<1x128xf32> to vector<8x128xf32>
    %8 = arith.subf %2, %7 : vector<8x128xf32>
    %9 = arith.mulf %8, %8 : vector<8x128xf32>
    %cst_5 = arith.constant dense<0.000000e+00> : vector<128xf32>
    %10 = vector.multi_reduction <add>, %9, %cst_5 [0] : vector<8x128xf32> to vector<128xf32>
    %11 = vector.shape_cast %10 : vector<128xf32> to vector<1x128xf32>
    %cst_6 = arith.constant 8.000000e+00 : f32
    %12 = vector.broadcast %cst_6 : f32 to vector<1x128xf32>
    %13 = arith.divf %11, %12 : vector<1x128xf32>
    %14 = arith.index_cast %arg0 : i32 to index
    %c0_7 = arith.constant 0 : index
    %c0_8 = arith.constant 0 : index
    %15 = vector.load %arg4[%14, %c0_7, %c0_8] : memref<2x2x128xf32, #tpu.memory_space<vmem>>, vector<1x2x128xf32>
    %16 = vector.shape_cast %15 : vector<1x2x128xf32> to vector<2x128xf32>
    %17 = vector.extract_strided_slice %16 {offsets = [0, 0], sizes = [1, 128], strides = [1, 1]} : vector<2x128xf32> to vector<1x128xf32>
    %cst_9 = arith.constant 9.99999974E-6 : f32
    %18 = vector.broadcast %cst_9 : f32 to vector<1x128xf32>
    %19 = arith.addf %13, %18 : vector<1x128xf32>
    %20 = math.rsqrt %19 : vector<1x128xf32>
    %21 = arith.mulf %17, %20 : vector<1x128xf32>
    %22 = vector.extract_strided_slice %16 {offsets = [1, 0], sizes = [1, 128], strides = [1, 1]} : vector<2x128xf32> to vector<1x128xf32>
    %23 = arith.mulf %6, %21 : vector<1x128xf32>
    %24 = arith.subf %22, %23 : vector<1x128xf32>
    %25 = vector.broadcast %21 : vector<1x128xf32> to vector<8x128xf32>
    %26 = arith.mulf %2, %25 : vector<8x128xf32>
    %27 = vector.broadcast %24 : vector<1x128xf32> to vector<8x128xf32>
    %28 = arith.addf %26, %27 : vector<8x128xf32>
    %cst_10 = arith.constant 0.000000e+00 : f32
    %29 = vector.broadcast %cst_10 : f32 to vector<8x128xf32>
    %30 = arith.maximumf %28, %29 : vector<8x128xf32>
    %c0_11 = arith.constant 0 : index
    %c0_12 = arith.constant 0 : index
    %31 = vector.load %arg5[%c0_11, %c0_12] : memref<8x128xf32, #tpu.memory_space<vmem>>, vector<8x128xf32>
    tpu.vector_store %arg5[%c0_11, %c0_12], %30 {strides = array<i32>} : memref<8x128xf32, #tpu.memory_space<vmem>>, vector<8x128xf32>,
    return
  }
  func.func @transform_0(%arg0: i32, %arg1: i32) -> (i32, i32) {
    %c0_i32 = arith.constant 0 : i32
    %c0_i32_0 = arith.constant 0 : i32
    return %c0_i32, %arg1 : i32, i32
  }
  func.func @transform_1(%arg0: i32, %arg1: i32) -> (i32, i32) {
    %c0_i32 = arith.constant 0 : i32
    return %arg0, %arg1 : i32, i32
  }
  func.func @transform_2(%arg0: i32, %arg1: i32) -> (i32, i32, i32) {
    %c0_i32 = arith.constant 0 : i32
    %c0_i32_0 = arith.constant 0 : i32
    %c0_i32_1 = arith.constant 0 : i32
    %c0_i32_2 = arith.constant 0 : i32
    return %c0_i32, %c0_i32_0, %c0_i32_1 : i32, i32, i32
  }
  func.func @transform_3(%arg0: i32, %arg1: i32) -> (i32, i32) {
    %c0_i32 = arith.constant 0 : i32
    %c0_i32_0 = arith.constant 0 : i32
    return %c0_i32, %arg0 : i32, i32
  }
}

</mosaic_0001>

<llo_original>
// kernel: tpu_custom_call.1
$region0: #{tpu_custom_call.1}
  #allocation0 [shape = 'u32[]', space=smem, size = 0x4, offset = 0x4, fixed_abs, tag = 'smem constant byte address 0x4 - core index']
  #allocation1 [shape = 'u32[144,128]{1,0:T(1,128)}', space=vmem, size = 0x12000, scoped, tag = 'internal scratch']
  %s0 = inlined_call_operand.hbm [shape: bf16[8,256], index: 0, kind: input, shape index: {}]
  %s1 = inlined_call_operand.hbm [shape: bf16[256,256], index: 1, kind: input, shape index: {}]
  %s2 = inlined_call_operand.hbm [shape: f32[2,2,128], index: 2, kind: input, shape index: {}]
  %s3 = inlined_call_operand.hbm [shape: f32[8,256], index: 3, kind: output, shape index: {}]
  %s4 = sld [smem:[#allocation0]]
  $region57: #{tpu_custom_call.1} parent=0
    _
  %s6 = ssub.s32 1, %s4
  %s7 = scalar_select 0, %s6, %s4
  $region1: #{tpu_custom_call.1} parent=0
    #allocation2 [shape = 'u8[4096]{0}', space=vmem, size = 0x1000, scoped, tag = 'input window, operand 0, single buffered']
    #allocation3 [shape = 's32[2]{0}', space=sflag, size = 0x8, scoped, tag = 'scoped memory for tpu_custom_call.1']
    #allocation4 [shape = 's32[2]{0}', space=sflag, size = 0x8, scoped, tag = 'scoped memory for tpu_custom_call.1']
    #allocation5 [shape = 'u8[131072]{0}', space=vmem, size = 0x20000, scoped, tag = 'input window, operand 1']
    #allocation6 [shape = 's32[2]{0}', space=sflag, size = 0x8, scoped, tag = 'scoped memory for tpu_custom_call.1']
    #allocation7 [shape = 'u8[2048]{0}', space=vmem, size = 0x800, scoped, tag = 'input window, operand 2, single buffered']
    #allocation8 [shape = 'u8[8192]{0}', space=vmem, size = 0x2000, scoped, tag = 'output window, operand 0']
    %8 = vsyncpa [#allocation3], 0
    %9 = vsyncpa [#allocation6], 0
    %s10 = scalar_lea.sflag [#allocation6], 1
    %11 = vsyncpa %s10, 0
    %12 = vsyncpa [#allocation4], 0
    %s13 = scalar_lea.sflag [#allocation4], 1
    %14 = vsyncpa %s13, 0
    loop: start=0, step=1, limit=4
    $region2: #{tpu_custom_call.1} parent=1 // loop_pre_header
      _
    $region3: #{tpu_custom_call.1} parent=1 // loop_header
      %s16 = sphi 0, %s20
      %p17 = scmp.ge.s32.totalorder %s16, 4
      %s23 = sphi 0, %s35
      %s24 = sphi 0, %s31
      %s25 = sphi 0, %s23
      %s26 = sphi 0, %s24
      %s27 = sphi 0, %s25
      %s28 = sphi 0, %s26
      %s38 = sphi 0, %s40
      %s41 = sphi 0, %s38
      %s42 = sphi 0, %s41
      %s58 = sphi 0, %s42
      %s66 = sphi 0, %s68
      %s69 = sphi 0, %s66
      %s70 = sphi 0, %s69
      %s86 = sphi 0, %s70
      %s90 = sphi 0, %s90
      %s92 = sphi 0, %s90
      %s93 = sphi 0, %s92
      %s107 = sphi 0, %s93
      %s113 = sphi 0, %s115
      %s116 = sphi 0, %s113
      %s117 = sphi 0, %s116
      %s133 = sphi 0, %s117
    $region4: #{tpu_custom_call.1} parent=1 // loop_header_branch
      %19 = sbr.rel (%p17) target = $region8
    $region5: #{tpu_custom_call.1} parent=1 // loop_body
      %s21 = ssub.s32 %s16, 1
      %s22 = ssub.s32 %s16, 2
      %s29 = sadd.s32 1, %s24
      %p30 = scmp.ge.s32.totalorder %s29, 1
      %s31 = scalar_select %p30, 0, %s29
      %s32 = sadd.s32 1, %s23
      %s33 = scalar_select %p30, %s32, %s23
      %p34 = scmp.ge.s32.totalorder %s33, 2
      %s35 = scalar_select %p34, 0, %s33
      %s36 = ssub.s32 %s24, %s31
      %p37 = scmp.eq.s32.totalorder %s36, 0
      %s39 = sadd.s32 %s38, 1
      %s40 = scalar_select %p37, %s38, %s39
      %p43 = pneg %p37
      %p44 = scmp.eq.s32.totalorder %s16, 1
      %p45 = por %p43, %p44
      %p46 = scmp.ne.s32.totalorder %s38, %s41
      %p47 = scmp.eq.s32.totalorder %s16, 0
      %p48 = por %p46, %p47
      %p49 = scmp.ne.s32.totalorder %s38, %s41
      %p50 = scmp.eq.s32.totalorder %s21, 1
      %p51 = por %p49, %p50
      %p52 = scmp.ne.s32.totalorder %s41, %s42
      %p53 = scmp.eq.s32.totalorder %s21, 0
      %p54 = por %p52, %p53
      %p55 = scmp.ne.s32.totalorder %s41, %s42
      %p56 = scmp.eq.s32.totalorder %s22, 1
      %p57 = por %p55, %p56
      %p59 = scmp.ne.s32.totalorder %s42, %s58
      %p60 = scmp.eq.s32.totalorder %s22, 0
      %p61 = por %p59, %p60
      %s62 = ssub.s32 %s23, %s35
      %s63 = ssub.s32 %s24, %s31
      %s64 = sor.u32 %s62, %s63
      %p65 = scmp.eq.s32.totalorder %s64, 0
      %s67 = sadd.s32 %s66, 1
      %s68 = scalar_select %p65, %s66, %s67
      %p71 = pneg %p65
      %p72 = scmp.eq.s32.totalorder %s16, 1
      %p73 = por %p71, %p72
      %p74 = scmp.ne.s32.totalorder %s66, %s69
      %p75 = scmp.eq.s32.totalorder %s16, 0
      %p76 = por %p74, %p75
      %p77 = scmp.ne.s32.totalorder %s66, %s69
      %p78 = scmp.eq.s32.totalorder %s21, 1
      %p79 = por %p77, %p78
      %p80 = scmp.ne.s32.totalorder %s69, %s70
      %p81 = scmp.eq.s32.totalorder %s21, 0
      %p82 = por %p80, %p81
      %p83 = scmp.ne.s32.totalorder %s69, %s70
      %p84 = scmp.eq.s32.totalorder %s22, 1
      %p85 = por %p83, %p84
      %p87 = scmp.ne.s32.totalorder %s70, %s86
      %p88 = scmp.eq.s32.totalorder %s22, 0
      %p89 = por %p87, %p88
      %s91 = sadd.s32 %s90, 1
      %p94 = scmp.eq.s32.totalorder %s16, 1
      %p95 = scmp.ne.s32.totalorder %s90, %s92
      %p96 = scmp.eq.s32.totalorder %s16, 0
      %p97 = por %p95, %p96
      %p98 = scmp.ne.s32.totalorder %s90, %s92
      %p99 = scmp.eq.s32.totalorder %s21, 1
      %p100 = por %p98, %p99
      %p101 = scmp.ne.s32.totalorder %s92, %s93
      %p102 = scmp.eq.s32.totalorder %s21, 0
      %p103 = por %p101, %p102
      %p104 = scmp.ne.s32.totalorder %s92, %s93
      %p105 = scmp.eq.s32.totalorder %s22, 1
      %p106 = por %p104, %p105
      %p108 = scmp.ne.s32.totalorder %s93, %s107
      %p109 = scmp.eq.s32.totalorder %s22, 0
      %p110 = por %p108, %p109
      %s111 = ssub.s32 %s23, %s35
      %p112 = scmp.eq.s32.totalorder %s111, 0
      %s114 = sadd.s32 %s113, 1
      %s115 = scalar_select %p112, %s113, %s114
      %p118 = pneg %p112
      %p119 = scmp.eq.s32.totalorder %s16, 1
      %p120 = por %p118, %p119
      %p121 = scmp.ne.s32.totalorder %s113, %s116
      %p122 = scmp.eq.s32.totalorder %s16, 0
      %p123 = por %p121, %p122
      %p124 = scmp.ne.s32.totalorder %s113, %s116
      %p125 = scmp.eq.s32.totalorder %s21, 1
      %p126 = por %p124, %p125
      %p127 = scmp.ne.s32.totalorder %s116, %s117
      %p128 = scmp.eq.s32.totalorder %s21, 0
      %p129 = por %p127, %p128
      %p130 = scmp.ne.s32.totalorder %s116, %s117
      %p131 = scmp.eq.s32.totalorder %s22, 1
      %p132 = por %p130, %p131
      %p134 = scmp.ne.s32.totalorder %s117, %s133
      %p135 = scmp.eq.s32.totalorder %s22, 0
      %p136 = por %p134, %p135
      %p137 = scmp.le.s32.totalorder 1, %s16
      %p138 = scmp.lt.s32.totalorder %s16, 3
      %p139 = pnand %p137, %p138
      %p140 = pneg %p139
      // Predicated region
      $region9: #{tpu_custom_call.1} parent=5 // pred_check
        _
      $region10: #{tpu_custom_call.1} parent=5 // pred_check_branch
        %142 = sbr.rel (%p139) target = $region12
      $region11: #{tpu_custom_call.1} parent=5 // pred_region
        %s143 = ssub.s32 %s16, 1
        // Predicated region
        $region13: #{tpu_custom_call.1} parent=11 // pred_check
          %p144 = pneg %p54
        $region14: #{tpu_custom_call.1} parent=11 // pred_check_branch
          %146 = sbr.rel (%p144) target = $region16
        $region15: #{tpu_custom_call.1} parent=11 // pred_region
          %s147 = smul.u32 2, %s26
          %s149 = ssub.s32 128, 128
          %150 = vsyncadd [#allocation3], %s149
          %s151 = smul.addr %s147, 64
          %s152 = scalar_lea.hbm %s0, %s151
          %s154 = sshll.u32 [#allocation2], 4
          %s155 = int_to_ptr.vmem [resolvable:$true] %s154
          %157 = dma.hbm_to_vmem [thread:$0]  %s152, 128, %s155, [#allocation3]
        $region16: #{tpu_custom_call.1} parent=11 // pred_fallthru
          _
        // Predicated region
        $region17: #{tpu_custom_call.1} parent=11 // pred_check
          %p158 = pneg %p103
        $region18: #{tpu_custom_call.1} parent=11 // pred_check_branch
          %160 = sbr.rel (%p158) target = $region20
        $region19: #{tpu_custom_call.1} parent=11 // pred_region
          %s162 = ssub.s32 64, 64
          %163 = vsyncadd [#allocation6], %s162
          %s164 = sshll.u32 [#allocation7], 4
          %s165 = int_to_ptr.vmem [resolvable:$true] %s164
          %170 = dma.hbm_to_vmem [thread:$0]  %s2, 64, %s165, [#allocation6], 32, 32, 2
        $region20: #{tpu_custom_call.1} parent=11 // pred_fallthru
          _
      $region12: #{tpu_custom_call.1} parent=5 // pred_fallthru
        _
      %p171 = scmp.lt.s32.totalorder %s16, 2
      // Predicated region
      $region21: #{tpu_custom_call.1} parent=5 // pred_check
        %p172 = pneg %p171
      $region22: #{tpu_custom_call.1} parent=5 // pred_check_branch
        %174 = sbr.rel (%p172) target = $region24
      $region23: #{tpu_custom_call.1} parent=5 // pred_region
        // Predicated region
        $region25: #{tpu_custom_call.1} parent=23 // pred_check
          %p175 = pneg %p76
        $region26: #{tpu_custom_call.1} parent=23 // pred_check_branch
          %177 = sbr.rel (%p175) target = $region28
        $region27: #{tpu_custom_call.1} parent=23 // pred_region
          %s178 = sand.u32 %s16, 1
          %s179 = scalar_lea.sflag [#allocation6], %s178
          %s180 = sand.u32 %s66, 1
          %s181 = smul.addr %s180, 128
          %s182 = scalar_lea.vmem [#allocation5], %s181
          %s183 = smul.u32 16, %s23
          %s184 = smul.u32 2, %s24
          %s186 = ssub.s32 2048, 2048
          %187 = vsyncadd %s179, %s186
          %s188 = smul.addr %s183, 2
          %s189 = sadd.s32 %s184, %s188
          %s190 = smul.addr %s189, 64
          %s191 = scalar_lea.hbm %s1, %s190
          %s192 = sshll.u32 %s182, 4
          %s193 = int_to_ptr.vmem [resolvable:$true] %s192
          %198 = dma.hbm_to_vmem [thread:$0]  %s191, 2048, %s193, %s179, 128, 128, 8
        $region28: #{tpu_custom_call.1} parent=23 // pred_fallthru
          _
      $region24: #{tpu_custom_call.1} parent=5 // pred_fallthru
        _
      %p199 = scmp.le.s32.totalorder 1, %s16
      %p200 = scmp.lt.s32.totalorder %s16, 3
      %p201 = pnand %p199, %p200
      %p202 = pneg %p201
      // Predicated region
      $region29: #{tpu_custom_call.1} parent=5 // pred_check
        _
      $region30: #{tpu_custom_call.1} parent=5 // pred_check_branch
        %204 = sbr.rel (%p201) target = $region32
      $region31: #{tpu_custom_call.1} parent=5 // pred_region
        %s205 = ssub.s32 %s16, 1
        // Predicated region
        $region33: #{tpu_custom_call.1} parent=31 // pred_check
          %p206 = pneg %p54
        $region34: #{tpu_custom_call.1} parent=31 // pred_check_branch
          %208 = sbr.rel (%p206) target = $region36
        $region35: #{tpu_custom_call.1} parent=31 // pred_region
          %209 = dma.done [#allocation3], 128
        $region36: #{tpu_custom_call.1} parent=31 // pred_fallthru
          _
        %s210 = sand.u32 %s21, 1
        %s211 = scalar_lea.sflag [#allocation6], %s210
        %s212 = sand.u32 %s69, 1
        %s213 = smul.addr %s212, 128
        %s214 = scalar_lea.vmem [#allocation5], %s213
        // Predicated region
        $region37: #{tpu_custom_call.1} parent=31 // pred_check
          %p215 = pneg %p82
        $region38: #{tpu_custom_call.1} parent=31 // pred_check_branch
          %217 = sbr.rel (%p215) target = $region40
        $region39: #{tpu_custom_call.1} parent=31 // pred_region
          %218 = dma.done %s211, 2048
        $region40: #{tpu_custom_call.1} parent=31 // pred_fallthru
          _
        // Predicated region
        $region41: #{tpu_custom_call.1} parent=31 // pred_check
          %p219 = pneg %p103
        $region42: #{tpu_custom_call.1} parent=31 // pred_check_branch
          %221 = sbr.rel (%p219) target = $region44
        $region43: #{tpu_custom_call.1} parent=31 // pred_region
          %222 = dma.done [#allocation6], 64
        $region44: #{tpu_custom_call.1} parent=31 // pred_fallthru
          _
        %p223 = pneg %p54
        %p224 = pneg %p51
        %s225 = sand.u32 %s21, 1
        %s226 = scalar_lea.sflag [#allocation6], %s225
        %s227 = sand.u32 %s69, 1
        %s228 = smul.addr %s227, 128
        %s229 = scalar_lea.vmem [#allocation5], %s228
        %p230 = pneg %p82
        %p231 = pneg %p79
        %p232 = pneg %p103
        %p233 = pneg %p100
        %p234 = pneg %p129
        %p235 = pneg %p126
        %s236 = sand.u32 %s116, 1
        %s237 = scalar_lea.sflag [#allocation4], %s236
        %s238 = sand.u32 %s116, 1
        %s239 = smul.addr %s238, 8
        %s240 = scalar_lea.vmem [#allocation8], %s239
        %s241 = smul.u32 2, %s26
        %s242 = smul.u32 16, %s25
        %s243 = smul.u32 2, %s26
        %v245 = vld [vmem:[#allocation2] sm:$0xff]
        %v246 = vld [vmem:[%s214] sm:$0xff]
        %v247 = vld [vmem:[%s214 + $0x8] sm:$0xff]
        %v248 = vld [vmem:[%s214 + $0x10] sm:$0xff]
        %v249 = vld [vmem:[%s214 + $0x18] sm:$0xff]
        %v250 = vld [vmem:[%s214 + $0x20] sm:$0xff]
        %v251 = vld [vmem:[%s214 + $0x28] sm:$0xff]
        %v252 = vld [vmem:[%s214 + $0x30] sm:$0xff]
        %v253 = vld [vmem:[%s214 + $0x38] sm:$0xff]
        %v254 = vld [vmem:[%s214 + $0x40] sm:$0xff]
        %v255 = vld [vmem:[%s214 + $0x48] sm:$0xff]
        %v256 = vld [vmem:[%s214 + $0x50] sm:$0xff]
        %v257 = vld [vmem:[%s214 + $0x58] sm:$0xff]
        %v258 = vld [vmem:[%s214 + $0x60] sm:$0xff]
        %v259 = vld [vmem:[%s214 + $0x68] sm:$0xff]
        %v260 = vld [vmem:[%s214 + $0x70] sm:$0xff]
        %v261 = vld [vmem:[%s214 + $0x78] sm:$0xff]
        %v263 = vunpack.c.l.b16 %v245
        %v264 = vunpack.c.h.b16 %v245
        %v265 = vpack.c.b16 %v263, %v263
        %v266 = vpack.c.b16 %v264, %v264
        %v285 = vunpack.c.l.b16 %v246
        %v286 = vunpack.c.h.b16 %v246
        %v287 = vunpack.c.l.b16 %v247
        %v288 = vunpack.c.h.b16 %v247
        %v289 = vunpack.c.l.b16 %v248
        %v290 = vunpack.c.h.b16 %v248
        %v291 = vunpack.c.l.b16 %v249
        %v292 = vunpack.c.h.b16 %v249
        %v293 = vunpack.c.l.b16 %v250
        %v294 = vunpack.c.h.b16 %v250
        %v295 = vunpack.c.l.b16 %v251
        %v296 = vunpack.c.h.b16 %v251
        %v297 = vunpack.c.l.b16 %v252
        %v298 = vunpack.c.h.b16 %v252
        %v299 = vunpack.c.l.b16 %v253
        %v300 = vunpack.c.h.b16 %v253
        %v301 = vunpack.c.l.b16 %v254
        %v302 = vunpack.c.h.b16 %v254
        %v303 = vunpack.c.l.b16 %v255
        %v304 = vunpack.c.h.b16 %v255
        %v305 = vunpack.c.l.b16 %v256
        %v306 = vunpack.c.h.b16 %v256
        %v307 = vunpack.c.l.b16 %v257
        %v308 = vunpack.c.h.b16 %v257
        %v309 = vunpack.c.l.b16 %v258
        %v310 = vunpack.c.h.b16 %v258
        %v311 = vunpack.c.l.b16 %v259
        %v312 = vunpack.c.h.b16 %v259
        %v313 = vunpack.c.l.b16 %v260
        %v314 = vunpack.c.h.b16 %v260
        %v315 = vunpack.c.l.b16 %v261
        %v316 = vunpack.c.h.b16 %v261
        %v317 = vpack.c.b16 %v287, %v285
        %v318 = vpack.c.b16 %v288, %v286
        %v319 = vpack.c.b16 %v291, %v289
        %v320 = vpack.c.b16 %v292, %v290
        %v321 = vpack.c.b16 %v295, %v293
        %v322 = vpack.c.b16 %v296, %v294
        %v323 = vpack.c.b16 %v299, %v297
        %v324 = vpack.c.b16 %v300, %v298
        %v325 = vpack.c.b16 %v303, %v301
        %v326 = vpack.c.b16 %v304, %v302
        %v327 = vpack.c.b16 %v307, %v305
        %v328 = vpack.c.b16 %v308, %v306
        %v329 = vpack.c.b16 %v311, %v309
        %v330 = vpack.c.b16 %v312, %v310
        %v331 = vpack.c.b16 %v315, %v313
        %v332 = vpack.c.b16 %v316, %v314
        %349 = vmatprep.subr.bf16.mxu0 %v332
        %350 = vmatpush1.bf16.xpose.msra.mxu0 %v331
        %351 = vmatprep.subr.bf16.mxu0 %v330
        %352 = vmatpush1.bf16.xpose.msra.mxu0 %v329
        %353 = vmatprep.subr.bf16.mxu0 %v328
        %354 = vmatpush1.bf16.xpose.msra.mxu0 %v327
        %355 = vmatprep.subr.bf16.mxu0 %v326
        %356 = vmatpush1.bf16.xpose.msra.mxu0 %v325
        %357 = vmatprep.subr.bf16.mxu0 %v324
        %358 = vmatpush1.bf16.xpose.msra.mxu0 %v323
        %359 = vmatprep.subr.bf16.mxu0 %v322
        %360 = vmatpush1.bf16.xpose.msra.mxu0 %v321
        %361 = vmatprep.subr.bf16.mxu0 %v320
        %362 = vmatpush1.bf16.xpose.msra.mxu0 %v319
        %363 = vmatprep.subr.bf16.mxu0 %v318
        %364 = vmatpush1.bf16.xpose.msra.mxu0 %v317
        %365 = vmatprep.subr.bf16.mxu0 0
        %366 = vmatpush2.bf16.xpose.msra.mxu0 0
        %367 = vmatprep.subr.bf16.mxu0 0
        %368 = vmatpush2.bf16.xpose.msra.mxu0 0
        %369 = vmatprep.subr.bf16.mxu0 0
        %370 = vmatpush2.bf16.xpose.msra.mxu0 0
        %371 = vmatprep.subr.bf16.mxu0 0
        %372 = vmatpush2.bf16.xpose.msra.mxu0 0
        %373 = vmatprep.subr.bf16.mxu0 0
        %374 = vmatpush2.bf16.xpose.msra.mxu0 0
        %375 = vmatprep.subr.bf16.mxu0 0
        %376 = vmatpush2.bf16.xpose.msra.mxu0 0
        %377 = vmatprep.subr.bf16.mxu0 0
        %378 = vmatpush2.bf16.xpose.msra.mxu0 0
        %379 = vmatprep.subr.bf16.mxu0 0
        %380 = vmatpush2.bf16.xpose.msra.mxu0 0
        %381 = vmatprep.mubr.bf16.mxu0 %v266
        %382 = vmatmul.mubr.bf16.gmra.mxu0 %v265
        %v383 = vpop.f32.mrf.mxu0
        %v384 = vadd.f32 0.0, %v383
        %v385 = vpop.f32.mrf.mxu0
        %v386 = vpop.f32.mrf.mxu0
        %v387 = vpop.f32.mrf.mxu0
        %388 = vdwg.mxu0
        %v389 = vrot.slane %v384, 4
        %v390 = vadd.f32 %v384, %v389
        %v391 = vrot.slane %v390, 2
        %v392 = vadd.f32 %v390, %v391
        %v393 = vrot.slane %v392, 1
        %v394 = vadd.f32 %v392, %v393
        %v395 = vrcp.pop 8.0
        %v396 = vmul.f32 %v394, %v395
        %v397 = vsub.f32 %v384, %v396
        %v398 = vmul.f32 %v397, %v397
        %v399 = vrot.slane %v398, 4
        %v400 = vadd.f32 %v398, %v399
        %v401 = vrot.slane %v400, 2
        %v402 = vadd.f32 %v400, %v401
        %v403 = vrot.slane %v402, 1
        %v404 = vadd.f32 %v402, %v403
        %v405 = vmul.f32 %v404, %v395
        %s406 = smul.u32 %s25, 2
        %s407 = scalar_lea.vmem [#allocation7], %s406
        %v408 = vld [vmem:[%s407] sm:$0x3]
        %v409 = vadd.f32 %v405, 1e-05
        %v410 = vrsqrt.pop %v409
        %v411 = vmul.f32 %v408, %v410
        %v412 = vmul.f32 %v396, %v411
        %v414 = vrot.slane %v412, 7
        %v416 = vsub.f32 %v408, %v414
        %v417 = vlaneseq
        %v418 = vshrl.u32 %v417, 7
        %v419 = vsub.s32 0, %v418
        %v420 = vrot.slane %v411, %v419
        %v421 = vmul.f32 %v384, %v420
        %v422 = vlaneseq
        %v423 = vshrl.u32 %v422, 7
        %v424 = vsub.s32 1, %v423
        %v425 = vrot.slane %v416, %v424
        %v426 = vadd.f32 %v421, %v425
        %v427 = vmax.f32 %v426, 0.0
        %428 = vst [vmem:[%s240] sm:$0xff] %v427
        %s429 = sand.u32 %s116, 1
        %s430 = scalar_lea.sflag [#allocation4], %s429
        %s431 = sand.u32 %s116, 1
        %s432 = smul.addr %s431, 8
        %s433 = scalar_lea.vmem [#allocation8], %s432
        // Predicated region
        $region45: #{tpu_custom_call.1} parent=31 // pred_check
          %p434 = pneg %p126
        $region46: #{tpu_custom_call.1} parent=31 // pred_check_branch
          %436 = sbr.rel (%p434) target = $region48
        $region47: #{tpu_custom_call.1} parent=31 // pred_region
          %s438 = ssub.s32 128, 128
          %439 = vsyncadd %s430, %s438
          %s440 = smul.addr %s25, 128
          %s441 = scalar_lea.hbm %s3, %s440
          %s443 = sshll.u32 %s433, 4
          %s444 = int_to_ptr.vmem [resolvable:$true] %s443
          %446 = dma.vmem_to_hbm [thread:$0]  %s444, 128, %s441, %s430
        $region48: #{tpu_custom_call.1} parent=31 // pred_fallthru
          _
      $region32: #{tpu_custom_call.1} parent=5 // pred_fallthru
        _
      %p447 = scmp.le.s32.totalorder 2, %s16
      // Predicated region
      $region49: #{tpu_custom_call.1} parent=5 // pred_check
        %p448 = pneg %p447
      $region50: #{tpu_custom_call.1} parent=5 // pred_check_branch
        %450 = sbr.rel (%p448) target = $region52
      $region51: #{tpu_custom_call.1} parent=5 // pred_region
        %s451 = ssub.s32 %s16, 2
        // Predicated region
        $region53: #{tpu_custom_call.1} parent=51 // pred_check
          %p452 = pneg %p132
        $region54: #{tpu_custom_call.1} parent=51 // pred_check_branch
          %454 = sbr.rel (%p452) target = $region56
        $region55: #{tpu_custom_call.1} parent=51 // pred_region
          %s455 = sand.u32 %s117, 1
          %s456 = scalar_lea.sflag [#allocation4], %s455
          %s457 = sand.u32 %s117, 1
          %s458 = smul.addr %s457, 8
          %s459 = scalar_lea.vmem [#allocation8], %s458
          %460 = dma.done %s456, 128
        $region56: #{tpu_custom_call.1} parent=51 // pred_fallthru
          _
      $region52: #{tpu_custom_call.1} parent=5 // pred_fallthru
        _
    $region6: #{tpu_custom_call.1} parent=1 // loop_footer
      %s20 = sadd.s32 1, %s16
    $region7: #{tpu_custom_call.1} parent=1 // loop_footer_branch
      %15 = sbr.rel target = $region3
    $region8: #{tpu_custom_call.1} parent=1 // loop_exit
      _
    %461 = vsyncpa [#allocation3], 1
    %s462 = scalar_lea.sflag [#allocation3], 1
    %463 = vsyncpa %s462, 1
    %464 = vsyncpa [#allocation6], 1
    %s465 = scalar_lea.sflag [#allocation6], 1
    %466 = vsyncpa %s465, 1
    %467 = vsyncpa [#allocation4], 1
    %s468 = scalar_lea.sflag [#allocation4], 1
    %469 = vsyncpa %s468, 1

</llo_original>
